<compile_context>
chip_gen: v6e
topology: v6e:2x2x1
jax: 0.10.0
libtpu: 0.0.40
codegen_flags: <defaults>
</compile_context>

<pallas_src>
import functools
import math
from enum import Enum

import jax
import jax.numpy as jnp
import numpy as np
from jax.experimental import pallas as pl
from jax.experimental.pallas import tpu as pltpu


class StatPoolMode(Enum):
    M = 0
    V = 1
    MV = 2


def _statpool_kernel(x_ref, *refs, inv_t, t_total, want_mean, want_std, mask_t):
    """Row-tiled statistics pooling with a T reduction grid axis.

    x_ref : (R, Tt) VMEM tile (rows = flattened leading dims, cols = time chunk)
    refs  : (*out_refs, *scratch_refs)
            out_refs     : [mean (R, 1)?] [std (R, 1)?]   (dtype = input dtype)
            scratch_refs : sum (R, 1) f32 [, sumsq (R, 1) f32 if want_std]
    """
    k = pl.program_id(1)
    n_out = int(want_mean) + int(want_std)
    out_refs = refs[:n_out]
    scratch = refs[n_out:]
    sum_ref = scratch[0]
    sumsq_ref = scratch[1] if want_std else None

    @pl.when(k == 0)
    def _init():
        sum_ref[...] = jnp.zeros_like(sum_ref)
        if want_std:
            sumsq_ref[...] = jnp.zeros_like(sumsq_ref)

    x = x_ref[...].astype(jnp.float32)          # (R, Tt), f32 accumulation
    if mask_t:
        t_tile = x.shape[-1]
        col = jax.lax.broadcasted_iota(jnp.int32, x.shape, 1) + k * t_tile
        x = jnp.where(col < t_total, x, 0.0)

    sum_ref[...] += jnp.sum(x, axis=-1, keepdims=True)
    if want_std:
        sumsq_ref[...] += jnp.sum(x * x, axis=-1, keepdims=True)

    @pl.when(k == pl.num_programs(1) - 1)
    def _finalize():
        outs = list(out_refs)
        m = sum_ref[...] * inv_t                          # E[x]
        if want_mean:
            mean_ref = outs.pop(0)
            mean_ref[...] = m.astype(mean_ref.dtype)
        if want_std:
            std_ref = outs.pop(0)
            m2 = sumsq_ref[...] * inv_t                   # E[x^2]
            var = jnp.maximum(m2 - m * m, 0.0)            # relu()
            std_ref[...] = jnp.sqrt(var).astype(std_ref.dtype)


def stat_pool_layer(x, mode: StatPoolMode = StatPoolMode.MV, dim: int = -1,
                    *, row_tile: int = 512, t_tile: int | None = None):
    """Pallas implementation of StatPoolLayer.forward.

    x: array with the pooled axis `dim` (default last). For the canonical
    (B, C, T) layout it returns (B, C) for M/V modes and (B, 2*C) for MV.
    """
    if mode not in (StatPoolMode.M, StatPoolMode.V, StatPoolMode.MV):
        raise ValueError("Operation's mode is incorrect")

    ndim = x.ndim
    dim = dim % ndim
    if dim != ndim - 1:
        x = jnp.moveaxis(x, dim, -1)
    lead_shape = x.shape[:-1]
    T = x.shape[-1]
    N = math.prod(lead_shape)
    x2 = x.reshape(N, T)

    if t_tile is None:
        # bf16/int8 inputs stream twice/four times the elements per HBM byte.
        t_tile = 4096 if x2.dtype.itemsize <= 2 else 2048

    # Row tile: multiple of 8 (sublanes) unless it is the full row extent.
    R = N if N <= row_tile else max(8, (row_tile // 8) * 8)
    # Time tile: multiple of 128 (lanes) unless it is the full time extent.
    Tt = T if T <= t_tile else max(128, (t_tile // 128) * 128)

    grid = (pl.cdiv(N, R), pl.cdiv(T, Tt))
    mask_t = (T % Tt) != 0

    want_mean = mode in (StatPoolMode.M, StatPoolMode.MV)
    want_std = mode in (StatPoolMode.V, StatPoolMode.MV)
    n_out = int(want_mean) + int(want_std)

    out_dtype = x2.dtype
    out_shapes = tuple(jax.ShapeDtypeStruct((N, 1), out_dtype)
                       for _ in range(n_out))
    out_specs = tuple(pl.BlockSpec((R, 1), lambda i, k: (i, 0))
                      for _ in range(n_out))

    scratch_shapes = [pltpu.VMEM((R, 1), jnp.float32)]
    if want_std:
        scratch_shapes.append(pltpu.VMEM((R, 1), jnp.float32))

    kernel = functools.partial(
        _statpool_kernel,
        inv_t=1.0 / T, t_total=T,
        want_mean=want_mean, want_std=want_std, mask_t=mask_t)

    outs = pl.pallas_call(
        kernel,
        out_shape=out_shapes,
        grid_spec=pltpu.PrefetchScalarGridSpec(
            num_scalar_prefetch=0,
            grid=grid,
            in_specs=[pl.BlockSpec((R, Tt), lambda i, k: (i, k))],
            out_specs=out_specs,
            scratch_shapes=scratch_shapes,
        ),
        compiler_params=pltpu.CompilerParams(
            dimension_semantics=("parallel", "arbitrary"),
            vmem_limit_bytes=48 * 1024 * 1024,
        ),
    )(x2)

    if not isinstance(outs, (list, tuple)):
        outs = [outs]
    outs = list(outs)
    mean_x = outs.pop(0).reshape(lead_shape) if want_mean else None
    std_x = outs.pop(0).reshape(lead_shape) if want_std else None

    if mode == StatPoolMode.M:
        out = mean_x
    elif mode == StatPoolMode.V:
        out = std_x
    else:
        out = jnp.concatenate([mean_x, std_x], axis=-1)

    # torch.flatten(out, 1)
    return out.reshape(out.shape[0], -1)


def _reference(x, mode: StatPoolMode):
    x = x.astype(jnp.float32)
    mean_x = x.mean(-1)
    mean_x2 = (x ** 2).mean(-1)
    std_x = jnp.sqrt(jnp.maximum(mean_x2 - mean_x ** 2, 0.0))
    if mode == StatPoolMode.M:
        out = mean_x
    elif mode == StatPoolMode.V:
        out = std_x
    else:
        out = jnp.concatenate([mean_x, std_x], axis=-1)
    return out.reshape(out.shape[0], -1)


if __name__ == "__main__":
    # StatPoolLayer has no learnable parameters — nothing to initialize.
    key = jax.random.PRNGKey(0)

    # Small (B, C, T) channels-first sequence, pooled over time.
    B, C, T = 2, 8, 16
    x = jax.random.normal(key, (B, C, T), dtype=jnp.float32)

    out_mv = jax.block_until_ready(stat_pool_layer(x, StatPoolMode.MV))
    np.testing.assert_allclose(np.asarray(out_mv),
                               np.asarray(_reference(x, StatPoolMode.MV)),
                               rtol=1e-5, atol=1e-5)
    assert out_mv.shape == (B, 2 * C)

    for mode in (StatPoolMode.M, StatPoolMode.V):
        out = jax.block_until_ready(stat_pool_layer(x, mode))
        np.testing.assert_allclose(np.asarray(out),
                                   np.asarray(_reference(x, mode)),
                                   rtol=1e-5, atol=1e-5)

    # Ragged shape exercising row tiling, the T reduction axis and the
    # in-kernel boundary mask (grid = (2, 5) with partial blocks on both axes).
    B2, C2, T2 = 3, 40, 517
    x2 = jax.random.normal(jax.random.PRNGKey(1), (B2, C2, T2),
                           dtype=jnp.float32)
    out2 = jax.block_until_ready(
        stat_pool_layer(x2, StatPoolMode.MV, row_tile=64, t_tile=128))
    np.testing.assert_allclose(np.asarray(out2),
                               np.asarray(_reference(x2, StatPoolMode.MV)),
                               rtol=1e-4, atol=1e-4)

    print("KERNEL_OK")
</pallas_src>

<mosaic_0001>
module attributes {stable_mosaic.version = 11 : i64} {
  func.func @_statpool_kernel(%arg0: i32, %arg1: i32, %arg2: memref<16x16xf32, #tpu.memory_space<vmem>>, %arg3: memref<16x1xf32, #tpu.memory_space<vmem>>, %arg4: memref<16x1xf32, #tpu.memory_space<vmem>>, %arg5: memref<16x1xf32, #tpu.memory_space<vmem>>, %arg6: memref<16x1xf32, #tpu.memory_space<vmem>>) attributes {dimension_semantics = [#tpu.dimension_semantics<parallel>, #tpu.dimension_semantics<arbitrary>], iteration_bounds = array<i64: 1, 1>, scalar_prefetch = 0 : i64, scratch_operands = 2 : i64, tpu.core_type = #tpu.core_type<tc>, window_params = [{transform_indices = @transform_0, window_bounds = array<i64: 16, 16>}, {transform_indices = @transform_1, window_bounds = array<i64: 16, 1>}, {transform_indices = @transform_2, window_bounds = array<i64: 16, 1>}]} {
    %c0_i32 = arith.constant 0 : i32
    %0 = arith.cmpi eq, %arg1, %c0_i32 : i32
    %1 = arith.extui %0 : i1 to i32
    %c0_i32_0 = arith.constant 0 : i32
    %2 = arith.cmpi ne, %1, %c0_i32_0 : i32
    scf.if %2 {
      %cst_13 = arith.constant 0.000000e+00 : f32
      %18 = vector.broadcast %cst_13 : f32 to vector<16x1xf32>
      %c0_14 = arith.constant 0 : index
      %c0_15 = arith.constant 0 : index
      %19 = vector.load %arg5[%c0_14, %c0_15] : memref<16x1xf32, #tpu.memory_space<vmem>>, vector<16x1xf32>
      tpu.vector_store %arg5[%c0_14, %c0_15], %18 {strides = array<i32>} : memref<16x1xf32, #tpu.memory_space<vmem>>, vector<16x1xf32>,
      %cst_16 = arith.constant 0.000000e+00 : f32
      %20 = vector.broadcast %cst_16 : f32 to vector<16x1xf32>
      %c0_17 = arith.constant 0 : index
      %c0_18 = arith.constant 0 : index
      %21 = vector.load %arg6[%c0_17, %c0_18] : memref<16x1xf32, #tpu.memory_space<vmem>>, vector<16x1xf32>
      tpu.vector_store %arg6[%c0_17, %c0_18], %20 {strides = array<i32>} : memref<16x1xf32, #tpu.memory_space<vmem>>, vector<16x1xf32>,
    } else {
    }
    %c0 = arith.constant 0 : index
    %c0_1 = arith.constant 0 : index
    %3 = vector.load %arg2[%c0, %c0_1] : memref<16x16xf32, #tpu.memory_space<vmem>>, vector<16x16xf32>
    %c0_2 = arith.constant 0 : index
    %c0_3 = arith.constant 0 : index
    %4 = vector.load %arg5[%c0_2, %c0_3] : memref<16x1xf32, #tpu.memory_space<vmem>>, vector<16x1xf32>
    %cst = arith.constant dense<0.000000e+00> : vector<16xf32>
    %5 = vector.multi_reduction <add>, %3, %cst [1] : vector<16x16xf32> to vector<16xf32>
    %6 = vector.shape_cast %5 : vector<16xf32> to vector<16x1xf32>
    %7 = arith.addf %4, %6 : vector<16x1xf32>
    %c0_4 = arith.constant 0 : index
    %c0_5 = arith.constant 0 : index
    %8 = vector.load %arg5[%c0_4, %c0_5] : memref<16x1xf32, #tpu.memory_space<vmem>>, vector<16x1xf32>
    tpu.vector_store %arg5[%c0_4, %c0_5], %7 {strides = array<i32>} : memref<16x1xf32, #tpu.memory_space<vmem>>, vector<16x1xf32>,
    %c0_6 = arith.constant 0 : index
    %c0_7 = arith.constant 0 : index
    %9 = vector.load %arg6[%c0_6, %c0_7] : memref<16x1xf32, #tpu.memory_space<vmem>>, vector<16x1xf32>
    %10 = arith.mulf %3, %3 : vector<16x16xf32>
    %cst_8 = arith.constant dense<0.000000e+00> : vector<16xf32>
    %11 = vector.multi_reduction <add>, %10, %cst_8 [1] : vector<16x16xf32> to vector<16xf32>
    %12 = vector.shape_cast %11 : vector<16xf32> to vector<16x1xf32>
    %13 = arith.addf %9, %12 : vector<16x1xf32>
    %c0_9 = arith.constant 0 : index
    %c0_10 = arith.constant 0 : index
    %14 = vector.load %arg6[%c0_9, %c0_10] : memref<16x1xf32, #tpu.memory_space<vmem>>, vector<16x1xf32>
    tpu.vector_store %arg6[%c0_9, %c0_10], %13 {strides = array<i32>} : memref<16x1xf32, #tpu.memory_space<vmem>>, vector<16x1xf32>,
    %c0_i32_11 = arith.constant 0 : i32
    %15 = arith.cmpi eq, %arg1, %c0_i32_11 : i32
    %16 = arith.extui %15 : i1 to i32
    %c0_i32_12 = arith.constant 0 : i32
    %17 = arith.cmpi ne, %16, %c0_i32_12 : i32
    scf.if %17 {
      %c0_13 = arith.constant 0 : index
      %c0_14 = arith.constant 0 : index
      %18 = vector.load %arg5[%c0_13, %c0_14] : memref<16x1xf32, #tpu.memory_space<vmem>>, vector<16x1xf32>
      %cst_15 = arith.constant 6.250000e-02 : f32
      %19 = vector.broadcast %cst_15 : f32 to vector<16x1xf32>
      %20 = arith.mulf %18, %19 : vector<16x1xf32>
      %c0_16 = arith.constant 0 : index
      %c0_17 = arith.constant 0 : index
      %21 = vector.load %arg3[%c0_16, %c0_17] : memref<16x1xf32, #tpu.memory_space<vmem>>, vector<16x1xf32>
      tpu.vector_store %arg3[%c0_16, %c0_17], %20 {strides = array<i32>} : memref<16x1xf32, #tpu.memory_space<vmem>>, vector<16x1xf32>,
      %c0_18 = arith.constant 0 : index
      %c0_19 = arith.constant 0 : index
      %22 = vector.load %arg6[%c0_18, %c0_19] : memref<16x1xf32, #tpu.memory_space<vmem>>, vector<16x1xf32>
      %cst_20 = arith.constant 6.250000e-02 : f32
      %23 = vector.broadcast %cst_20 : f32 to vector<16x1xf32>
      %24 = arith.mulf %22, %23 : vector<16x1xf32>
      %25 = arith.mulf %20, %20 : vector<16x1xf32>
      %26 = arith.subf %24, %25 : vector<16x1xf32>
      %cst_21 = arith.constant 0.000000e+00 : f32
      %27 = vector.broadcast %cst_21 : f32 to vector<16x1xf32>
      %28 = arith.maximumf %26, %27 : vector<16x1xf32>
      %29 = math.sqrt %28 : vector<16x1xf32>
      %c0_22 = arith.constant 0 : index
      %c0_23 = arith.constant 0 : index
      %30 = vector.load %arg4[%c0_22, %c0_23] : memref<16x1xf32, #tpu.memory_space<vmem>>, vector<16x1xf32>
      tpu.vector_store %arg4[%c0_22, %c0_23], %29 {strides = array<i32>} : memref<16x1xf32, #tpu.memory_space<vmem>>, vector<16x1xf32>,
    } else {
    }
    return
  }
  func.func @transform_0(%arg0: i32, %arg1: i32) -> (i32, i32) {
    %c0_i32 = arith.constant 0 : i32
    return %arg0, %arg1 : i32, i32
  }
  func.func @transform_1(%arg0: i32, %arg1: i32) -> (i32, i32) {
    %c0_i32 = arith.constant 0 : i32
    %c0_i32_0 = arith.constant 0 : i32
    return %arg0, %c0_i32 : i32, i32
  }
  func.func @transform_2(%arg0: i32, %arg1: i32) -> (i32, i32) {
    %c0_i32 = arith.constant 0 : i32
    %c0_i32_0 = arith.constant 0 : i32
    return %arg0, %c0_i32 : i32, i32
  }
}

</mosaic_0001>

<llo_original>
// kernel: tpu_custom_call.1
$region0: #{tpu_custom_call.1}
  #allocation0 [shape = 'u32[]', space=smem, size = 0x4, offset = 0x4, fixed_abs, tag = 'smem constant byte address 0x4 - core index']
  #allocation1 [shape = 'u32[144,128]{1,0:T(1,128)}', space=vmem, size = 0x12000, scoped, tag = 'internal scratch']
  #allocation2 [shape = 'f32[16,1]{1,0:T(8,128)}', space=vmem, size = 0x2000, scoped, tag = 'scratch operand']
  #allocation3 [shape = 'f32[16,1]{1,0:T(8,128)}', space=vmem, size = 0x2000, scoped, tag = 'scratch operand']
  %s0 = inlined_call_operand.hbm [shape: f32[16,16], index: 0, kind: input, shape index: {}]
  %s1 = inlined_call_operand.vmem [shape: f32[16,1], index: 1, kind: output, shape index: {0}]
  %s2 = inlined_call_operand.vmem [shape: f32[16,1], index: 2, kind: output, shape index: {1}]
  %3 = xla_tuple %s1, %s2
  %s4 = sld [smem:[#allocation0]]
  $region34: #{tpu_custom_call.1} parent=0
    _
  %s6 = ssub.s32 1, %s4
  %s7 = scalar_select 0, %s6, %s4
  $region1: #{tpu_custom_call.1} parent=0
    #allocation4 [shape = 'u8[8192]{0}', space=vmem, size = 0x2000, scoped, tag = 'input window, operand 0, single buffered']
    #allocation5 [shape = 's32[1]{0}', space=sflag, size = 0x4, scoped, tag = 'scoped memory for tpu_custom_call.1']
    %8 = vsyncpa [#allocation5], 0
    // Predicated region
    $region2: #{tpu_custom_call.1} parent=1 // pred_check
      _
    $region3: #{tpu_custom_call.1} parent=1 // pred_check_branch
      %10 = sbr.rel (0) target = $region5
    $region4: #{tpu_custom_call.1} parent=1 // pred_region
      %s12 = ssub.s32 256, 256
      %13 = vsyncadd [#allocation5], %s12
      %s14 = sshll.u32 [#allocation4], 4
      %s15 = int_to_ptr.vmem [resolvable:$true] %s14
      %20 = dma.hbm_to_vmem [thread:$0]  %s0, 256, %s15, [#allocation5], 128, 128, 8
    $region5: #{tpu_custom_call.1} parent=1 // pred_fallthru
      _
    // Predicated region
    $region6: #{tpu_custom_call.1} parent=1 // pred_check
      _
    $region7: #{tpu_custom_call.1} parent=1 // pred_check_branch
      %22 = sbr.rel (0) target = $region9
    $region8: #{tpu_custom_call.1} parent=1 // pred_region
      %23 = dma.done [#allocation5], 256
    $region9: #{tpu_custom_call.1} parent=1 // pred_fallthru
      _
    %p24 = scmp.eq.s32.totalorder 0, 0
    // Predicated region
    $region10: #{tpu_custom_call.1} parent=1 // pred_check
      %p25 = pneg %p24
    $region11: #{tpu_custom_call.1} parent=1 // pred_check_branch
      %27 = sbr.rel (%p25) target = $region13
    $region12: #{tpu_custom_call.1} parent=1 // pred_region
      %vm28 = vcmask 7168
      %29 = vst.msk [vmem:[#allocation2] sm:$0xff] %vm28, 0.0
      %30 = vst.msk [vmem:[#allocation2 + $0x8] sm:$0xff] %vm28, 0.0
      %31 = vst.msk [vmem:[#allocation3] sm:$0xff] %vm28, 0.0
      %32 = vst.msk [vmem:[#allocation3 + $0x8] sm:$0xff] %vm28, 0.0
    $region13: #{tpu_custom_call.1} parent=1 // pred_fallthru
      _
    %v33 = vld [vmem:[#allocation4] sm:$0xff]
    %v34 = vld [vmem:[#allocation4 + $0x8] sm:$0xff]
    %v35 = vld [vmem:[#allocation2] sm:$0xff]
    %v36 = vld [vmem:[#allocation2 + $0x8] sm:$0xff]
    %vm37 = vcmask 130048
    %v38 = vsel %vm37, %v33, 0.0
    %39 = vadd.xlane.f32.xlu0 %v38
    %v40 = vpop.xlane.xlu0 %39
    %v41 = vsel %vm37, %v34, 0.0
    %42 = vadd.xlane.f32.xlu0 %v41
    %v43 = vpop.xlane.xlu0 %42
    %v44 = vadd.f32 %v35, %v40
    %v45 = vadd.f32 %v36, %v43
    %vm46 = vcmask 7168
    %47 = vst.msk [vmem:[#allocation2] sm:$0xff] %vm46, %v44
    %48 = vst.msk [vmem:[#allocation2 + $0x8] sm:$0xff] %vm46, %v45
    %v49 = vld [vmem:[#allocation3] sm:$0xff]
    %v50 = vld [vmem:[#allocation3 + $0x8] sm:$0xff]
    %v51 = vmul.f32 %v33, %v33
    %v52 = vmul.f32 %v34, %v34
    %v53 = vsel %vm37, %v51, 0.0
    %54 = vadd.xlane.f32.xlu0 %v53
    %v55 = vpop.xlane.xlu0 %54
    %v56 = vsel %vm37, %v52, 0.0
    %57 = vadd.xlane.f32.xlu0 %v56
    %v58 = vpop.xlane.xlu0 %57
    %v59 = vadd.f32 %v49, %v55
    %v60 = vadd.f32 %v50, %v58
    %61 = vst.msk [vmem:[#allocation3] sm:$0xff] %vm46, %v59
    %62 = vst.msk [vmem:[#allocation3 + $0x8] sm:$0xff] %vm46, %v60
    // Predicated region
    $region14: #{tpu_custom_call.1} parent=1 // pred_check
      %p63 = pneg %p24
    $region15: #{tpu_custom_call.1} parent=1 // pred_check_branch
      %65 = sbr.rel (%p63) target = $region17
    $region16: #{tpu_custom_call.1} parent=1 // pred_region
      %v66 = vld [vmem:[#allocation2] sm:$0xff]
      %v67 = vld [vmem:[#allocation2 + $0x8] sm:$0xff]
      %v68 = vmul.f32 %v66, 0.0625
      %v69 = vmul.f32 %v67, 0.0625
      %70 = vst.msk [vmem:[%s1] sm:$0xff] %vm46, %v68
      %71 = vst.msk [vmem:[%s1 + $0x8] sm:$0xff] %vm46, %v69
      %v72 = vld [vmem:[#allocation3] sm:$0xff]
      %v73 = vld [vmem:[#allocation3 + $0x8] sm:$0xff]
      %v74 = vmul.f32 %v72, 0.0625
      %v75 = vmul.f32 %v73, 0.0625
      %v76 = vmul.f32 %v68, %v68
      %v77 = vmul.f32 %v69, %v69
      %v78 = vsub.f32 %v74, %v76
      %v79 = vsub.f32 %v75, %v77
      %v80 = vmax.f32 %v78, 0.0
      %v81 = vmax.f32 %v79, 0.0
      %v82 = vrsqrt.pop %v80
      %v83 = vmul.f32 %v80, %v82
      %vm84 = vcmp.eq.f32.partialorder %v80, inf
      %v85 = vsel %vm84, %v80, %v83
      %vm86 = vcmp.eq.f32.partialorder %v80, 0.0
      %v87 = vand.u32 %v80, 2147483648
      %v88 = vsel %vm86, %v87, %v85
      %v89 = vrsqrt.pop %v81
      %v90 = vmul.f32 %v81, %v89
      %vm91 = vcmp.eq.f32.partialorder %v81, inf
      %v92 = vsel %vm91, %v81, %v90
      %vm93 = vcmp.eq.f32.partialorder %v81, 0.0
      %v94 = vand.u32 %v81, 2147483648
      %v95 = vsel %vm93, %v94, %v92
      %96 = vst.msk [vmem:[%s2] sm:$0xff] %vm46, %v88
      %97 = vst.msk [vmem:[%s2 + $0x8] sm:$0xff] %vm46, %v95
    $region17: #{tpu_custom_call.1} parent=1 // pred_fallthru
      _
    // Predicated region
    $region18: #{tpu_custom_call.1} parent=1 // pred_check
      _
    $region19: #{tpu_custom_call.1} parent=1 // pred_check_branch
      %99 = sbr.rel (0) target = $region21
    $region20: #{tpu_custom_call.1} parent=1 // pred_region
      _
    $region21: #{tpu_custom_call.1} parent=1 // pred_fallthru
      _
    // Predicated region
    $region22: #{tpu_custom_call.1} parent=1 // pred_check
      _
    $region23: #{tpu_custom_call.1} parent=1 // pred_check_branch
      %101 = sbr.rel (0) target = $region25
    $region24: #{tpu_custom_call.1} parent=1 // pred_region
      _
    $region25: #{tpu_custom_call.1} parent=1 // pred_fallthru
      _
    // Predicated region
    $region26: #{tpu_custom_call.1} parent=1 // pred_check
      _
    $region27: #{tpu_custom_call.1} parent=1 // pred_check_branch
      %103 = sbr.rel (0) target = $region29
    $region28: #{tpu_custom_call.1} parent=1 // pred_region
      _
    $region29: #{tpu_custom_call.1} parent=1 // pred_fallthru
      _
    // Predicated region
    $region30: #{tpu_custom_call.1} parent=1 // pred_check
      _
    $region31: #{tpu_custom_call.1} parent=1 // pred_check_branch
      %105 = sbr.rel (0) target = $region33
    $region32: #{tpu_custom_call.1} parent=1 // pred_region
      _
    $region33: #{tpu_custom_call.1} parent=1 // pred_fallthru
      _
    %106 = vsyncpa [#allocation5], 1

</llo_original>
